<compile_context>
chip_gen: v7x
topology: tpu7x:2x2x1
jax: 0.10.0
libtpu: 0.0.40
codegen_flags: <defaults>
</compile_context>

<pallas_src>
import jax
import jax.numpy as jnp
from jax.experimental import pallas as pl
from jax.experimental.pallas import tpu as pltpu
import numpy as np


def _round_up(x, m):
    return (x + m - 1) // m * m


def fused_char_cnn_kernel(idx_ref, wc_ref, b_ref, o_ref):
    """Fused embedding-gather + Conv1d + MaxPool1d for one tile of words.

    idx_ref: (TM, W)        int32    character indices for TM words
    wc_ref : (W*Vp, T*Fp)   bfloat16 combined embedding+Toeplitz conv weight
    b_ref  : (1, Fp)        float32  conv bias (zero-padded to Fp lanes)
    o_ref  : (TM, Fp)       float32  max-pooled conv output (lane-dense)
    """
    TM, W = idx_ref.shape
    Cin, Cout = wc_ref.shape
    Fp = b_ref.shape[1]
    Vp = Cin // W
    T = Cout // Fp

    idx = idx_ref[...]                                              # (TM, W) int32
    lane = jax.lax.broadcasted_iota(jnp.int32, (TM, Cin), 1)        # 0 .. Cin-1 per lane

    # One-hot "code" matrix: lane (w*Vp + v) is 1 iff idx[n, w] == v.
    # Built with W broadcast-compares on the VPU (no reshapes / relayouts).
    onehot = jnp.zeros((TM, Cin), dtype=jnp.bfloat16)
    for w in range(W):
        code_w = idx[:, w:w + 1] + w * Vp                           # (TM, 1)
        onehot = onehot + (lane == code_w).astype(jnp.bfloat16)

    # Single full-width MXU matmul: embedding gather + all conv taps + all positions.
    conv = jnp.dot(onehot, wc_ref[...],
                   preferred_element_type=jnp.float32)              # (TM, T*Fp) f32

    # Max-pool over the T conv positions: static slices at 128-lane boundaries.
    pooled = conv[:, 0:Fp]
    for t in range(1, T):
        pooled = jnp.maximum(pooled, conv[:, t * Fp:(t + 1) * Fp])

    o_ref[...] = pooled + b_ref[...]


def cnn_forward(x_idx, emb_table, conv_w, conv_b, *, tile_m=2048):
    """x_idx: (B, S, W) int32 char indices. Returns (B, S, F) float32."""
    B, S, W = x_idx.shape
    V, E = emb_table.shape
    F, E2, K = conv_w.shape                 # PyTorch Conv1d weight layout: (out, in, kernel)
    assert E2 == E
    T = W - K + 1                            # conv positions == MaxPool1d kernel size
    N = B * S

    Vp = _round_up(V, 8)                     # pad vocab so per-word code blocks are aligned
    Fp = _round_up(F, 128)                   # lane-dense output / per-position column groups
    Cin, Cout = W * Vp, T * Fp

    # TODO(synk): dropout is identity in eval mode; training-mode dropout mask not implemented.

    # --- Fold embedding table + conv weight into one combined Toeplitz matrix (host, tiny).
    wt = jnp.zeros((W, E, T, F), jnp.float32)
    for t in range(T):
        for j in range(K):
            wt = wt.at[t + j, :, t, :].set(conv_w[:, :, j].T.astype(jnp.float32))
    wc = jnp.einsum("ve,wetf->wvtf", emb_table.astype(jnp.float32), wt,
                    precision=jax.lax.Precision.HIGHEST)            # (W, V, T, F) f32
    wc = jnp.zeros((W, Vp, T, Fp), jnp.float32).at[:, :V, :, :F].set(wc)
    wc = wc.reshape(Cin, Cout).astype(jnp.bfloat16)                 # bf16 operand for MXU

    bias = jnp.zeros((1, Fp), jnp.float32).at[0, :F].set(conv_b.astype(jnp.float32))

    # --- Tile the flattened word axis; pad N up to a multiple of the tile.
    TM = min(tile_m, _round_up(N, 8))
    N_pad = _round_up(N, TM)
    idx = x_idx.reshape(N, W).astype(jnp.int32)
    if N_pad != N:
        idx = jnp.pad(idx, ((0, N_pad - N), (0, 0)))                # pad rows use index 0 (valid)

    cost = pl.CostEstimate(
        flops=2 * N_pad * Cin * Cout,
        transcendentals=0,
        bytes_accessed=N_pad * W * 4 + N_pad * Fp * 4 + Cin * Cout * 2 + Fp * 4,
    )

    out = pl.pallas_call(
        fused_char_cnn_kernel,
        out_shape=jax.ShapeDtypeStruct((N_pad, Fp), jnp.float32),
        grid=(pl.cdiv(N_pad, TM),),
        in_specs=[
            pl.BlockSpec((TM, W), lambda i: (i, 0)),                # streamed, double-buffered
            pl.BlockSpec((Cin, Cout), lambda i: (0, 0)),            # resident weight
            pl.BlockSpec((1, Fp), lambda i: (0, 0)),                # resident bias
        ],
        out_specs=pl.BlockSpec((TM, Fp), lambda i: (i, 0)),
        compiler_params=pltpu.CompilerParams(dimension_semantics=("parallel",)),
        cost_estimate=cost,
    )(idx, wc, bias)

    return out[:N, :F].reshape(B, S, F)


def reference_forward(x_idx, emb_table, conv_w, conv_b):
    """Pure-JAX f32 reference mirroring the PyTorch forward (eval mode)."""
    B, S, W = x_idx.shape
    E = emb_table.shape[1]
    F, _, K = conv_w.shape
    T = W - K + 1
    x = jnp.take(emb_table, x_idx.reshape(-1), axis=0).reshape(B * S, W, E)
    patches = jnp.stack([x[:, t:t + K, :] for t in range(T)], axis=1)   # (N, T, K, E)
    conv_out = jnp.einsum("ntke,fek->ntf", patches, conv_w,
                          precision=jax.lax.Precision.HIGHEST) + conv_b[None, None, :]
    pooled = jnp.max(conv_out, axis=1)                                   # (N, F)
    return pooled.reshape(B, S, F)


if __name__ == "__main__":
    # Module hyperparameters (small, consistent with the forward pass).
    chars_vocab_size = 30
    char_embed_size = 32   # E
    kernel_size = 3        # K
    num_filters = 64       # F
    max_word_length = 8    # W
    batch_size = 2         # B
    seq_len = 8            # S

    key = jax.random.PRNGKey(0)
    k_emb, k_w, k_b, k_x = jax.random.split(key, 4)

    emb_bound = np.sqrt(3.0 / char_embed_size)
    emb_table = jax.random.uniform(
        k_emb, (chars_vocab_size, char_embed_size),
        minval=-emb_bound, maxval=emb_bound, dtype=jnp.float32)

    fan_in = char_embed_size * kernel_size
    conv_bound = 1.0 / np.sqrt(fan_in)
    conv_w = jax.random.uniform(
        k_w, (num_filters, char_embed_size, kernel_size),
        minval=-conv_bound, maxval=conv_bound, dtype=jnp.float32)
    conv_b = jax.random.uniform(
        k_b, (num_filters,), minval=-conv_bound, maxval=conv_bound,
        dtype=jnp.float32)

    # Input: integer character indices, shape (B, S, W).
    x_idx = jax.random.randint(
        k_x, (batch_size, seq_len, max_word_length), 0, chars_vocab_size,
        dtype=jnp.int32)

    out = cnn_forward(x_idx, emb_table, conv_w, conv_b)
    out = jax.block_until_ready(out)

    ref = reference_forward(x_idx, emb_table, conv_w, conv_b)
    assert out.shape == (batch_size, seq_len, num_filters), out.shape
    # Tolerance reflects the bf16 weight operand (f32 accumulation); errors are O(1e-4-1e-3).
    np.testing.assert_allclose(np.asarray(out), np.asarray(ref),
                               rtol=1e-2, atol=5e-3)
    print("KERNEL_OK")
</pallas_src>

<mosaic_0001>
module attributes {stable_mosaic.version = 11 : i64} {
  func.func @fused_char_cnn_kernel(%arg0: i32, %arg1: memref<16x8xi32, #tpu.memory_space<vmem>>, %arg2: memref<256x768xbf16, #tpu.memory_space<vmem>>, %arg3: memref<1x128xf32, #tpu.memory_space<vmem>>, %arg4: memref<16x128xf32, #tpu.memory_space<vmem>>) attributes {dimension_semantics = [#tpu.dimension_semantics<parallel>], iteration_bounds = array<i64: 1>, scalar_prefetch = 0 : i64, scratch_operands = 0 : i64, tpu.core_type = #tpu.core_type<tc>, window_params = [{transform_indices = @transform_0, window_bounds = array<i64: 16, 8>}, {pipeline_mode = #tpu.pipeline_mode<synchronous>, transform_indices = @transform_1, window_bounds = array<i64: 256, 768>}, {pipeline_mode = #tpu.pipeline_mode<synchronous>, transform_indices = @transform_2, window_bounds = array<i64: 1, 128>}, {transform_indices = @transform_3, window_bounds = array<i64: 16, 128>}]} {
    %c0 = arith.constant 0 : index
    %c0_0 = arith.constant 0 : index
    %0 = vector.load %arg1[%c0, %c0_0] : memref<16x8xi32, #tpu.memory_space<vmem>>, vector<16x8xi32>
    %1 = tpu.iota {dimensions = array<i32: 1>} : vector<16x256xi32>
    %cst = arith.constant 0.000000e+00 : bf16
    %2 = vector.broadcast %cst : bf16 to vector<16x256xbf16>
    %3 = vector.extract_strided_slice %0 {offsets = [0, 0], sizes = [16, 1], strides = [1, 1]} : vector<16x8xi32> to vector<16x1xi32>
    %c0_i32 = arith.constant 0 : i32
    %4 = vector.broadcast %c0_i32 : i32 to vector<16x1xi32>
    %5 = arith.addi %3, %4 : vector<16x1xi32>
    %6 = vector.broadcast %5 : vector<16x1xi32> to vector<16x256xi32>
    %7 = arith.cmpi eq, %1, %6 : vector<16x256xi32>
    %8 = arith.extui %7 : vector<16x256xi1> to vector<16x256xi32>
    %9 = arith.sitofp %8 : vector<16x256xi32> to vector<16x256xf32>
    %10 = arith.truncf %9 : vector<16x256xf32> to vector<16x256xbf16>
    %11 = arith.addf %2, %10 : vector<16x256xbf16>
    %12 = vector.extract_strided_slice %0 {offsets = [0, 1], sizes = [16, 1], strides = [1, 1]} : vector<16x8xi32> to vector<16x1xi32>
    %c32_i32 = arith.constant 32 : i32
    %13 = vector.broadcast %c32_i32 : i32 to vector<16x1xi32>
    %14 = arith.addi %12, %13 : vector<16x1xi32>
    %15 = vector.broadcast %14 : vector<16x1xi32> to vector<16x256xi32>
    %16 = arith.cmpi eq, %1, %15 : vector<16x256xi32>
    %17 = arith.extui %16 : vector<16x256xi1> to vector<16x256xi32>
    %18 = arith.sitofp %17 : vector<16x256xi32> to vector<16x256xf32>
    %19 = arith.truncf %18 : vector<16x256xf32> to vector<16x256xbf16>
    %20 = arith.addf %11, %19 : vector<16x256xbf16>
    %21 = vector.extract_strided_slice %0 {offsets = [0, 2], sizes = [16, 1], strides = [1, 1]} : vector<16x8xi32> to vector<16x1xi32>
    %c64_i32 = arith.constant 64 : i32
    %22 = vector.broadcast %c64_i32 : i32 to vector<16x1xi32>
    %23 = arith.addi %21, %22 : vector<16x1xi32>
    %24 = vector.broadcast %23 : vector<16x1xi32> to vector<16x256xi32>
    %25 = arith.cmpi eq, %1, %24 : vector<16x256xi32>
    %26 = arith.extui %25 : vector<16x256xi1> to vector<16x256xi32>
    %27 = arith.sitofp %26 : vector<16x256xi32> to vector<16x256xf32>
    %28 = arith.truncf %27 : vector<16x256xf32> to vector<16x256xbf16>
    %29 = arith.addf %20, %28 : vector<16x256xbf16>
    %30 = vector.extract_strided_slice %0 {offsets = [0, 3], sizes = [16, 1], strides = [1, 1]} : vector<16x8xi32> to vector<16x1xi32>
    %c96_i32 = arith.constant 96 : i32
    %31 = vector.broadcast %c96_i32 : i32 to vector<16x1xi32>
    %32 = arith.addi %30, %31 : vector<16x1xi32>
    %33 = vector.broadcast %32 : vector<16x1xi32> to vector<16x256xi32>
    %34 = arith.cmpi eq, %1, %33 : vector<16x256xi32>
    %35 = arith.extui %34 : vector<16x256xi1> to vector<16x256xi32>
    %36 = arith.sitofp %35 : vector<16x256xi32> to vector<16x256xf32>
    %37 = arith.truncf %36 : vector<16x256xf32> to vector<16x256xbf16>
    %38 = arith.addf %29, %37 : vector<16x256xbf16>
    %39 = vector.extract_strided_slice %0 {offsets = [0, 4], sizes = [16, 1], strides = [1, 1]} : vector<16x8xi32> to vector<16x1xi32>
    %c128_i32 = arith.constant 128 : i32
    %40 = vector.broadcast %c128_i32 : i32 to vector<16x1xi32>
    %41 = arith.addi %39, %40 : vector<16x1xi32>
    %42 = vector.broadcast %41 : vector<16x1xi32> to vector<16x256xi32>
    %43 = arith.cmpi eq, %1, %42 : vector<16x256xi32>
    %44 = arith.extui %43 : vector<16x256xi1> to vector<16x256xi32>
    %45 = arith.sitofp %44 : vector<16x256xi32> to vector<16x256xf32>
    %46 = arith.truncf %45 : vector<16x256xf32> to vector<16x256xbf16>
    %47 = arith.addf %38, %46 : vector<16x256xbf16>
    %48 = vector.extract_strided_slice %0 {offsets = [0, 5], sizes = [16, 1], strides = [1, 1]} : vector<16x8xi32> to vector<16x1xi32>
    %c160_i32 = arith.constant 160 : i32
    %49 = vector.broadcast %c160_i32 : i32 to vector<16x1xi32>
    %50 = arith.addi %48, %49 : vector<16x1xi32>
    %51 = vector.broadcast %50 : vector<16x1xi32> to vector<16x256xi32>
    %52 = arith.cmpi eq, %1, %51 : vector<16x256xi32>
    %53 = arith.extui %52 : vector<16x256xi1> to vector<16x256xi32>
    %54 = arith.sitofp %53 : vector<16x256xi32> to vector<16x256xf32>
    %55 = arith.truncf %54 : vector<16x256xf32> to vector<16x256xbf16>
    %56 = arith.addf %47, %55 : vector<16x256xbf16>
    %57 = vector.extract_strided_slice %0 {offsets = [0, 6], sizes = [16, 1], strides = [1, 1]} : vector<16x8xi32> to vector<16x1xi32>
    %c192_i32 = arith.constant 192 : i32
    %58 = vector.broadcast %c192_i32 : i32 to vector<16x1xi32>
    %59 = arith.addi %57, %58 : vector<16x1xi32>
    %60 = vector.broadcast %59 : vector<16x1xi32> to vector<16x256xi32>
    %61 = arith.cmpi eq, %1, %60 : vector<16x256xi32>
    %62 = arith.extui %61 : vector<16x256xi1> to vector<16x256xi32>
    %63 = arith.sitofp %62 : vector<16x256xi32> to vector<16x256xf32>
    %64 = arith.truncf %63 : vector<16x256xf32> to vector<16x256xbf16>
    %65 = arith.addf %56, %64 : vector<16x256xbf16>
    %66 = vector.extract_strided_slice %0 {offsets = [0, 7], sizes = [16, 1], strides = [1, 1]} : vector<16x8xi32> to vector<16x1xi32>
    %c224_i32 = arith.constant 224 : i32
    %67 = vector.broadcast %c224_i32 : i32 to vector<16x1xi32>
    %68 = arith.addi %66, %67 : vector<16x1xi32>
    %69 = vector.broadcast %68 : vector<16x1xi32> to vector<16x256xi32>
    %70 = arith.cmpi eq, %1, %69 : vector<16x256xi32>
    %71 = arith.extui %70 : vector<16x256xi1> to vector<16x256xi32>
    %72 = arith.sitofp %71 : vector<16x256xi32> to vector<16x256xf32>
    %73 = arith.truncf %72 : vector<16x256xf32> to vector<16x256xbf16>
    %74 = arith.addf %65, %73 : vector<16x256xbf16>
    %c0_1 = arith.constant 0 : index
    %c0_2 = arith.constant 0 : index
    %75 = vector.load %arg2[%c0_1, %c0_2] : memref<256x768xbf16, #tpu.memory_space<vmem>>, vector<256x768xbf16>
    %cst_3 = arith.constant dense<0.000000e+00> : vector<16x768xf32>
    %76 = tpu.matmul %74, %75, %cst_3 {dimension_numbers = #tpu.dot_dimension_numbers<[1], [0], [0], [1], [0, 0, 1, 1], [], []>} : vector<16x256xbf16>, vector<256x768xbf16>, vector<16x768xf32> -> vector<16x768xf32>
    %77 = vector.extract_strided_slice %76 {offsets = [0, 0], sizes = [16, 128], strides = [1, 1]} : vector<16x768xf32> to vector<16x128xf32>
    %78 = vector.extract_strided_slice %76 {offsets = [0, 128], sizes = [16, 128], strides = [1, 1]} : vector<16x768xf32> to vector<16x128xf32>
    %79 = arith.maximumf %77, %78 : vector<16x128xf32>
    %80 = vector.extract_strided_slice %76 {offsets = [0, 256], sizes = [16, 128], strides = [1, 1]} : vector<16x768xf32> to vector<16x128xf32>
    %81 = arith.maximumf %79, %80 : vector<16x128xf32>
    %82 = vector.extract_strided_slice %76 {offsets = [0, 384], sizes = [16, 128], strides = [1, 1]} : vector<16x768xf32> to vector<16x128xf32>
    %83 = arith.maximumf %81, %82 : vector<16x128xf32>
    %84 = vector.extract_strided_slice %76 {offsets = [0, 512], sizes = [16, 128], strides = [1, 1]} : vector<16x768xf32> to vector<16x128xf32>
    %85 = arith.maximumf %83, %84 : vector<16x128xf32>
    %86 = vector.extract_strided_slice %76 {offsets = [0, 640], sizes = [16, 128], strides = [1, 1]} : vector<16x768xf32> to vector<16x128xf32>
    %87 = arith.maximumf %85, %86 : vector<16x128xf32>
    %c0_4 = arith.constant 0 : index
    %c0_5 = arith.constant 0 : index
    %88 = vector.load %arg3[%c0_4, %c0_5] : memref<1x128xf32, #tpu.memory_space<vmem>>, vector<1x128xf32>
    %89 = vector.broadcast %88 : vector<1x128xf32> to vector<16x128xf32>
    %90 = arith.addf %87, %89 : vector<16x128xf32>
    %c0_6 = arith.constant 0 : index
    %c0_7 = arith.constant 0 : index
    %91 = vector.load %arg4[%c0_6, %c0_7] : memref<16x128xf32, #tpu.memory_space<vmem>>, vector<16x128xf32>
    tpu.vector_store %arg4[%c0_6, %c0_7], %90 {strides = array<i32>} : memref<16x128xf32, #tpu.memory_space<vmem>>, vector<16x128xf32>,
    return
  }
  func.func @transform_0(%arg0: i32) -> (i32, i32) {
    %c0_i32 = arith.constant 0 : i32
    %c0_i32_0 = arith.constant 0 : i32
    return %arg0, %c0_i32 : i32, i32
  }
  func.func @transform_1(%arg0: i32) -> (i32, i32) {
    %c0_i32 = arith.constant 0 : i32
    %c0_i32_0 = arith.constant 0 : i32
    %c0_i32_1 = arith.constant 0 : i32
    return %c0_i32, %c0_i32_0 : i32, i32
  }
  func.func @transform_2(%arg0: i32) -> (i32, i32) {
    %c0_i32 = arith.constant 0 : i32
    %c0_i32_0 = arith.constant 0 : i32
    %c0_i32_1 = arith.constant 0 : i32
    return %c0_i32, %c0_i32_0 : i32, i32
  }
  func.func @transform_3(%arg0: i32) -> (i32, i32) {
    %c0_i32 = arith.constant 0 : i32
    %c0_i32_0 = arith.constant 0 : i32
    return %arg0, %c0_i32 : i32, i32
  }
}

</mosaic_0001>

<llo_original>
// kernel: tpu_custom_call.1
$region0: #{tpu_custom_call.1}
  #allocation0 [shape = 'u32[]', space=smem, size = 0x4, offset = 0x4, fixed_abs, tag = 'smem constant byte address 0x4 - core index']
  #allocation1 [shape = 'u32[144,128]{1,0:T(1,128)}', space=vmem, size = 0x12000, scoped, tag = 'internal scratch']
  %s0 = inlined_call_operand.vmem [shape: s32[16,8], index: 0, kind: input, shape index: {}]
  %s1 = inlined_call_operand.hbm [shape: bf16[256,768], index: 1, kind: input, shape index: {}]
  %s2 = inlined_call_operand.vmem [shape: f32[1,128], index: 2, kind: input, shape index: {}]
  %s3 = inlined_call_operand.hbm [shape: f32[16,128], index: 3, kind: output, shape index: {}]
  %s4 = sld [smem:[#allocation0]]
  $region26: #{tpu_custom_call.1} parent=0
    _
  %s6 = ssub.s32 1, %s4
  %s7 = scalar_select 0, %s6, %s4
  $region1: #{tpu_custom_call.1} parent=0
    #allocation2 [shape = 'u8[393216]{0}', space=vmem, size = 0x60000, scoped, tag = 'input window, operand 1, single buffered']
    #allocation3 [shape = 's32[1]{0}', space=sflag, size = 0x4, scoped, tag = 'scoped memory for tpu_custom_call.1']
    #allocation4 [shape = 's32[1]{0}', space=sflag, size = 0x4, scoped, tag = 'scoped memory for tpu_custom_call.1']
    #allocation5 [shape = 'u8[8192]{0}', space=vmem, size = 0x2000, scoped, tag = 'output window, operand 0, single buffered']
    %8 = vsyncpa [#allocation3], 0
    %9 = vsyncpa [#allocation4], 0
    // Predicated region
    $region2: #{tpu_custom_call.1} parent=1 // pred_check
      _
    $region3: #{tpu_custom_call.1} parent=1 // pred_check_branch
      %11 = sbr.rel (0) target = $region5
    $region4: #{tpu_custom_call.1} parent=1 // pred_region
      _
    $region5: #{tpu_custom_call.1} parent=1 // pred_fallthru
      _
    // Predicated region
    $region6: #{tpu_custom_call.1} parent=1 // pred_check
      _
    $region7: #{tpu_custom_call.1} parent=1 // pred_check_branch
      %13 = sbr.rel (0) target = $region9
    $region8: #{tpu_custom_call.1} parent=1 // pred_region
      %s15 = ssub.s32 12288, 12288
      %16 = vsyncadd [#allocation3], %s15
      %s17 = sshll.u32 [#allocation2], 4
      %s18 = int_to_ptr.vmem [resolvable:$true] %s17
      %23 = dma.hbm_to_vmem [thread:$0]  %s1, 12288, %s18, [#allocation3], 384, 384, 24
    $region9: #{tpu_custom_call.1} parent=1 // pred_fallthru
      _
    // Predicated region
    $region10: #{tpu_custom_call.1} parent=1 // pred_check
      _
    $region11: #{tpu_custom_call.1} parent=1 // pred_check_branch
      %25 = sbr.rel (0) target = $region13
    $region12: #{tpu_custom_call.1} parent=1 // pred_region
      _
    $region13: #{tpu_custom_call.1} parent=1 // pred_fallthru
      _
    // Predicated region
    $region14: #{tpu_custom_call.1} parent=1 // pred_check
      _
    $region15: #{tpu_custom_call.1} parent=1 // pred_check_branch
      %27 = sbr.rel (0) target = $region17
    $region16: #{tpu_custom_call.1} parent=1 // pred_region
      %28 = dma.done [#allocation3], 12288
    $region17: #{tpu_custom_call.1} parent=1 // pred_fallthru
      _
    %v30 = vld [vmem:[%s0] sm:$0xff]
    %v31 = vld [vmem:[%s0 + $0x8] sm:$0xff]
    %v32 = vlaneseq
    %v33 = vand.u32 %v32, 127
    %v34 = vadd.s32 %v33, 128
    %35 = vset.pattern.permute.xlu0 0
    %36 = vperm.xlu0 %35, %v30
    %v37 = vpop.permute.xlu0 %36
    %38 = vset.pattern.permute.xlu0 0
    %39 = vperm.xlu0 %38, %v31
    %v40 = vpop.permute.xlu0 %39
    %vm41 = vcmp.eq.s32.totalorder %v33, %v37
    %vm42 = vcmp.eq.s32.totalorder %v34, %v37
    %vm43 = vcmp.eq.s32.totalorder %v33, %v40
    %vm44 = vcmp.eq.s32.totalorder %v34, %v40
    %v45 = vsel %vm41, 1, 0
    %v46 = vsel %vm42, 1, 0
    %v47 = vsel %vm43, 1, 0
    %v48 = vsel %vm44, 1, 0
    %v49 = vcvt.s32.f32 %v45
    %v50 = vcvt.s32.f32 %v46
    %v51 = vcvt.s32.f32 %v47
    %v52 = vcvt.s32.f32 %v48
    %v53 = vpack.c.bf16 %v51, %v49
    %v54 = vpack.c.bf16 %v52, %v50
    %v55 = vadd.bf16 %v53, 0
    %v56 = vadd.bf16 %v54, 0
    %v57 = vadd.s32 %v30, 32
    %v58 = vadd.s32 %v31, 32
    %59 = vset.pattern.permute.xlu0 1
    %60 = vperm.xlu0 %59, %v57
    %v61 = vpop.permute.xlu0 %60
    %62 = vset.pattern.permute.xlu0 1
    %63 = vperm.xlu0 %62, %v58
    %v64 = vpop.permute.xlu0 %63
    %vm65 = vcmp.eq.s32.totalorder %v33, %v61
    %vm66 = vcmp.eq.s32.totalorder %v34, %v61
    %vm67 = vcmp.eq.s32.totalorder %v33, %v64
    %vm68 = vcmp.eq.s32.totalorder %v34, %v64
    %v69 = vsel %vm65, 1, 0
    %v70 = vsel %vm66, 1, 0
    %v71 = vsel %vm67, 1, 0
    %v72 = vsel %vm68, 1, 0
    %v73 = vcvt.s32.f32 %v69
    %v74 = vcvt.s32.f32 %v70
    %v75 = vcvt.s32.f32 %v71
    %v76 = vcvt.s32.f32 %v72
    %v77 = vpack.c.bf16 %v75, %v73
    %v78 = vpack.c.bf16 %v76, %v74
    %v79 = vadd.bf16 %v55, %v77
    %v80 = vadd.bf16 %v56, %v78
    %v81 = vadd.s32 %v30, 64
    %v82 = vadd.s32 %v31, 64
    %83 = vset.pattern.permute.xlu0 2
    %84 = vperm.xlu0 %83, %v81
    %v85 = vpop.permute.xlu0 %84
    %86 = vset.pattern.permute.xlu0 2
    %87 = vperm.xlu0 %86, %v82
    %v88 = vpop.permute.xlu0 %87
    %vm89 = vcmp.eq.s32.totalorder %v33, %v85
    %vm90 = vcmp.eq.s32.totalorder %v34, %v85
    %vm91 = vcmp.eq.s32.totalorder %v33, %v88
    %vm92 = vcmp.eq.s32.totalorder %v34, %v88
    %v93 = vsel %vm89, 1, 0
    %v94 = vsel %vm90, 1, 0
    %v95 = vsel %vm91, 1, 0
    %v96 = vsel %vm92, 1, 0
    %v97 = vcvt.s32.f32 %v93
    %v98 = vcvt.s32.f32 %v94
    %v99 = vcvt.s32.f32 %v95
    %v100 = vcvt.s32.f32 %v96
    %v101 = vpack.c.bf16 %v99, %v97
    %v102 = vpack.c.bf16 %v100, %v98
    %v103 = vadd.bf16 %v79, %v101
    %v104 = vadd.bf16 %v80, %v102
    %v105 = vadd.s32 %v30, 96
    %v106 = vadd.s32 %v31, 96
    %107 = vset.pattern.permute.xlu0 3
    %108 = vperm.xlu0 %107, %v105
    %v109 = vpop.permute.xlu0 %108
    %110 = vset.pattern.permute.xlu0 3
    %111 = vperm.xlu0 %110, %v106
    %v112 = vpop.permute.xlu0 %111
    %vm113 = vcmp.eq.s32.totalorder %v33, %v109
    %vm114 = vcmp.eq.s32.totalorder %v34, %v109
    %vm115 = vcmp.eq.s32.totalorder %v33, %v112
    %vm116 = vcmp.eq.s32.totalorder %v34, %v112
    %v117 = vsel %vm113, 1, 0
    %v118 = vsel %vm114, 1, 0
    %v119 = vsel %vm115, 1, 0
    %v120 = vsel %vm116, 1, 0
    %v121 = vcvt.s32.f32 %v117
    %v122 = vcvt.s32.f32 %v118
    %v123 = vcvt.s32.f32 %v119
    %v124 = vcvt.s32.f32 %v120
    %v125 = vpack.c.bf16 %v123, %v121
    %v126 = vpack.c.bf16 %v124, %v122
    %v127 = vadd.bf16 %v103, %v125
    %v128 = vadd.bf16 %v104, %v126
    %v129 = vadd.s32 %v30, 128
    %v130 = vadd.s32 %v31, 128
    %131 = vset.pattern.permute.xlu0 4
    %132 = vperm.xlu0 %131, %v129
    %v133 = vpop.permute.xlu0 %132
    %134 = vset.pattern.permute.xlu0 4
    %135 = vperm.xlu0 %134, %v130
    %v136 = vpop.permute.xlu0 %135
    %vm137 = vcmp.eq.s32.totalorder %v33, %v133
    %vm138 = vcmp.eq.s32.totalorder %v34, %v133
    %vm139 = vcmp.eq.s32.totalorder %v33, %v136
    %vm140 = vcmp.eq.s32.totalorder %v34, %v136
    %v141 = vsel %vm137, 1, 0
    %v142 = vsel %vm138, 1, 0
    %v143 = vsel %vm139, 1, 0
    %v144 = vsel %vm140, 1, 0
    %v145 = vcvt.s32.f32 %v141
    %v146 = vcvt.s32.f32 %v142
    %v147 = vcvt.s32.f32 %v143
    %v148 = vcvt.s32.f32 %v144
    %v149 = vpack.c.bf16 %v147, %v145
    %v150 = vpack.c.bf16 %v148, %v146
    %v151 = vadd.bf16 %v127, %v149
    %v152 = vadd.bf16 %v128, %v150
    %v153 = vadd.s32 %v30, 160
    %v154 = vadd.s32 %v31, 160
    %155 = vset.pattern.permute.xlu0 5
    %156 = vperm.xlu0 %155, %v153
    %v157 = vpop.permute.xlu0 %156
    %158 = vset.pattern.permute.xlu0 5
    %159 = vperm.xlu0 %158, %v154
    %v160 = vpop.permute.xlu0 %159
    %vm161 = vcmp.eq.s32.totalorder %v33, %v157
    %vm162 = vcmp.eq.s32.totalorder %v34, %v157
    %vm163 = vcmp.eq.s32.totalorder %v33, %v160
    %vm164 = vcmp.eq.s32.totalorder %v34, %v160
    %v165 = vsel %vm161, 1, 0
    %v166 = vsel %vm162, 1, 0
    %v167 = vsel %vm163, 1, 0
    %v168 = vsel %vm164, 1, 0
    %v169 = vcvt.s32.f32 %v165
    %v170 = vcvt.s32.f32 %v166
    %v171 = vcvt.s32.f32 %v167
    %v172 = vcvt.s32.f32 %v168
    %v173 = vpack.c.bf16 %v171, %v169
    %v174 = vpack.c.bf16 %v172, %v170
    %v175 = vadd.bf16 %v151, %v173
    %v176 = vadd.bf16 %v152, %v174
    %v177 = vadd.s32 %v30, 192
    %v178 = vadd.s32 %v31, 192
    %179 = vset.pattern.permute.xlu0 6
    %180 = vperm.xlu0 %179, %v177
    %v181 = vpop.permute.xlu0 %180
    %182 = vset.pattern.permute.xlu0 6
    %183 = vperm.xlu0 %182, %v178
    %v184 = vpop.permute.xlu0 %183
    %vm185 = vcmp.eq.s32.totalorder %v33, %v181
    %vm186 = vcmp.eq.s32.totalorder %v34, %v181
    %vm187 = vcmp.eq.s32.totalorder %v33, %v184
    %vm188 = vcmp.eq.s32.totalorder %v34, %v184
    %v189 = vsel %vm185, 1, 0
    %v190 = vsel %vm186, 1, 0
    %v191 = vsel %vm187, 1, 0
    %v192 = vsel %vm188, 1, 0
    %v193 = vcvt.s32.f32 %v189
    %v194 = vcvt.s32.f32 %v190
    %v195 = vcvt.s32.f32 %v191
    %v196 = vcvt.s32.f32 %v192
    %v197 = vpack.c.bf16 %v195, %v193
    %v198 = vpack.c.bf16 %v196, %v194
    %v199 = vadd.bf16 %v175, %v197
    %v200 = vadd.bf16 %v176, %v198
    %v201 = vadd.s32 %v30, 224
    %v202 = vadd.s32 %v31, 224
    %203 = vset.pattern.permute.xlu0 7
    %204 = vperm.xlu0 %203, %v201
    %v205 = vpop.permute.xlu0 %204
    %206 = vset.pattern.permute.xlu0 7
    %207 = vperm.xlu0 %206, %v202
    %v208 = vpop.permute.xlu0 %207
    %vm209 = vcmp.eq.s32.totalorder %v33, %v205
    %vm210 = vcmp.eq.s32.totalorder %v34, %v205
    %vm211 = vcmp.eq.s32.totalorder %v33, %v208
    %vm212 = vcmp.eq.s32.totalorder %v34, %v208
    %v213 = vsel %vm209, 1, 0
    %v214 = vsel %vm210, 1, 0
    %v215 = vsel %vm211, 1, 0
    %v216 = vsel %vm212, 1, 0
    %v217 = vcvt.s32.f32 %v213
    %v218 = vcvt.s32.f32 %v214
    %v219 = vcvt.s32.f32 %v215
    %v220 = vcvt.s32.f32 %v216
    %v221 = vpack.c.bf16 %v219, %v217
    %v222 = vpack.c.bf16 %v220, %v218
    %v223 = vadd.bf16 %v199, %v221
    %v224 = vadd.bf16 %v200, %v222
    %v225 = vld [vmem:[#allocation2] sm:$0xff]
    %v226 = vld [vmem:[#allocation2 + $0x8] sm:$0xff]
    %v227 = vld [vmem:[#allocation2 + $0x10] sm:$0xff]
    %v228 = vld [vmem:[#allocation2 + $0x18] sm:$0xff]
    %v229 = vld [vmem:[#allocation2 + $0x20] sm:$0xff]
    %v230 = vld [vmem:[#allocation2 + $0x28] sm:$0xff]
    %v231 = vld [vmem:[#allocation2 + $0x30] sm:$0xff]
    %v232 = vld [vmem:[#allocation2 + $0x38] sm:$0xff]
    %v233 = vld [vmem:[#allocation2 + $0x40] sm:$0xff]
    %v234 = vld [vmem:[#allocation2 + $0x48] sm:$0xff]
    %v235 = vld [vmem:[#allocation2 + $0x50] sm:$0xff]
    %v236 = vld [vmem:[#allocation2 + $0x58] sm:$0xff]
    %v237 = vld [vmem:[#allocation2 + $0x60] sm:$0xff]
    %v238 = vld [vmem:[#allocation2 + $0x68] sm:$0xff]
    %v239 = vld [vmem:[#allocation2 + $0x70] sm:$0xff]
    %v240 = vld [vmem:[#allocation2 + $0x78] sm:$0xff]
    %v241 = vld [vmem:[#allocation2 + $0x80] sm:$0xff]
    %v242 = vld [vmem:[#allocation2 + $0x88] sm:$0xff]
    %v243 = vld [vmem:[#allocation2 + $0x90] sm:$0xff]
    %v244 = vld [vmem:[#allocation2 + $0x98] sm:$0xff]
    %v245 = vld [vmem:[#allocation2 + $0xa0] sm:$0xff]
    %v246 = vld [vmem:[#allocation2 + $0xa8] sm:$0xff]
    %v247 = vld [vmem:[#allocation2 + $0xb0] sm:$0xff]
    %v248 = vld [vmem:[#allocation2 + $0xb8] sm:$0xff]
    %v249 = vld [vmem:[#allocation2 + $0xc0] sm:$0xff]
    %v250 = vld [vmem:[#allocation2 + $0xc8] sm:$0xff]
    %v251 = vld [vmem:[#allocation2 + $0xd0] sm:$0xff]
    %v252 = vld [vmem:[#allocation2 + $0xd8] sm:$0xff]
    %v253 = vld [vmem:[#allocation2 + $0xe0] sm:$0xff]
    %v254 = vld [vmem:[#allocation2 + $0xe8] sm:$0xff]
    %v255 = vld [vmem:[#allocation2 + $0xf0] sm:$0xff]
    %v256 = vld [vmem:[#allocation2 + $0xf8] sm:$0xff]
    %v257 = vld [vmem:[#allocation2 + $0x100] sm:$0xff]
    %v258 = vld [vmem:[#allocation2 + $0x108] sm:$0xff]
    %v259 = vld [vmem:[#allocation2 + $0x110] sm:$0xff]
    %v260 = vld [vmem:[#allocation2 + $0x118] sm:$0xff]
    %v261 = vld [vmem:[#allocation2 + $0x120] sm:$0xff]
    %v262 = vld [vmem:[#allocation2 + $0x128] sm:$0xff]
    %v263 = vld [vmem:[#allocation2 + $0x130] sm:$0xff]
    %v264 = vld [vmem:[#allocation2 + $0x138] sm:$0xff]
    %v265 = vld [vmem:[#allocation2 + $0x140] sm:$0xff]
    %v266 = vld [vmem:[#allocation2 + $0x148] sm:$0xff]
    %v267 = vld [vmem:[#allocation2 + $0x150] sm:$0xff]
    %v268 = vld [vmem:[#allocation2 + $0x158] sm:$0xff]
    %v269 = vld [vmem:[#allocation2 + $0x160] sm:$0xff]
    %v270 = vld [vmem:[#allocation2 + $0x168] sm:$0xff]
    %v271 = vld [vmem:[#allocation2 + $0x170] sm:$0xff]
    %v272 = vld [vmem:[#allocation2 + $0x178] sm:$0xff]
    %v273 = vld [vmem:[#allocation2 + $0x180] sm:$0xff]
    %v274 = vld [vmem:[#allocation2 + $0x188] sm:$0xff]
    %v275 = vld [vmem:[#allocation2 + $0x190] sm:$0xff]
    %v276 = vld [vmem:[#allocation2 + $0x198] sm:$0xff]
    %v277 = vld [vmem:[#allocation2 + $0x1a0] sm:$0xff]
    %v278 = vld [vmem:[#allocation2 + $0x1a8] sm:$0xff]
    %v279 = vld [vmem:[#allocation2 + $0x1b0] sm:$0xff]
    %v280 = vld [vmem:[#allocation2 + $0x1b8] sm:$0xff]
    %v281 = vld [vmem:[#allocation2 + $0x1c0] sm:$0xff]
    %v282 = vld [vmem:[#allocation2 + $0x1c8] sm:$0xff]
    %v283 = vld [vmem:[#allocation2 + $0x1d0] sm:$0xff]
    %v284 = vld [vmem:[#allocation2 + $0x1d8] sm:$0xff]
    %v285 = vld [vmem:[#allocation2 + $0x1e0] sm:$0xff]
    %v286 = vld [vmem:[#allocation2 + $0x1e8] sm:$0xff]
    %v287 = vld [vmem:[#allocation2 + $0x1f0] sm:$0xff]
    %v288 = vld [vmem:[#allocation2 + $0x1f8] sm:$0xff]
    %v289 = vld [vmem:[#allocation2 + $0x200] sm:$0xff]
    %v290 = vld [vmem:[#allocation2 + $0x208] sm:$0xff]
    %v291 = vld [vmem:[#allocation2 + $0x210] sm:$0xff]
    %v292 = vld [vmem:[#allocation2 + $0x218] sm:$0xff]
    %v293 = vld [vmem:[#allocation2 + $0x220] sm:$0xff]
    %v294 = vld [vmem:[#allocation2 + $0x228] sm:$0xff]
    %v295 = vld [vmem:[#allocation2 + $0x230] sm:$0xff]
    %v296 = vld [vmem:[#allocation2 + $0x238] sm:$0xff]
    %v297 = vld [vmem:[#allocation2 + $0x240] sm:$0xff]
    %v298 = vld [vmem:[#allocation2 + $0x248] sm:$0xff]
    %v299 = vld [vmem:[#allocation2 + $0x250] sm:$0xff]
    %v300 = vld [vmem:[#allocation2 + $0x258] sm:$0xff]
    %v301 = vld [vmem:[#allocation2 + $0x260] sm:$0xff]
    %v302 = vld [vmem:[#allocation2 + $0x268] sm:$0xff]
    %v303 = vld [vmem:[#allocation2 + $0x270] sm:$0xff]
    %v304 = vld [vmem:[#allocation2 + $0x278] sm:$0xff]
    %v305 = vld [vmem:[#allocation2 + $0x280] sm:$0xff]
    %v306 = vld [vmem:[#allocation2 + $0x288] sm:$0xff]
    %v307 = vld [vmem:[#allocation2 + $0x290] sm:$0xff]
    %v308 = vld [vmem:[#allocation2 + $0x298] sm:$0xff]
    %v309 = vld [vmem:[#allocation2 + $0x2a0] sm:$0xff]
    %v310 = vld [vmem:[#allocation2 + $0x2a8] sm:$0xff]
    %v311 = vld [vmem:[#allocation2 + $0x2b0] sm:$0xff]
    %v312 = vld [vmem:[#allocation2 + $0x2b8] sm:$0xff]
    %v313 = vld [vmem:[#allocation2 + $0x2c0] sm:$0xff]
    %v314 = vld [vmem:[#allocation2 + $0x2c8] sm:$0xff]
    %v315 = vld [vmem:[#allocation2 + $0x2d0] sm:$0xff]
    %v316 = vld [vmem:[#allocation2 + $0x2d8] sm:$0xff]
    %v317 = vld [vmem:[#allocation2 + $0x2e0] sm:$0xff]
    %v318 = vld [vmem:[#allocation2 + $0x2e8] sm:$0xff]
    %v319 = vld [vmem:[#allocation2 + $0x2f0] sm:$0xff]
    %v320 = vld [vmem:[#allocation2 + $0x2f8] sm:$0xff]
    %v417 = vunpack.c.l.b16 %v225
    %v418 = vunpack.c.h.b16 %v225
    %v419 = vunpack.c.l.b16 %v226
    %v420 = vunpack.c.h.b16 %v226
    %v421 = vunpack.c.l.b16 %v227
    %v422 = vunpack.c.h.b16 %v227
    %v423 = vunpack.c.l.b16 %v228
    %v424 = vunpack.c.h.b16 %v228
    %v425 = vunpack.c.l.b16 %v229
    %v426 = vunpack.c.h.b16 %v229
    %v427 = vunpack.c.l.b16 %v230
    %v428 = vunpack.c.h.b16 %v230
    %v429 = vunpack.c.l.b16 %v231
    %v430 = vunpack.c.h.b16 %v231
    %v431 = vunpack.c.l.b16 %v232
    %v432 = vunpack.c.h.b16 %v232
    %v433 = vunpack.c.l.b16 %v233
    %v434 = vunpack.c.h.b16 %v233
    %v435 = vunpack.c.l.b16 %v234
    %v436 = vunpack.c.h.b16 %v234
    %v437 = vunpack.c.l.b16 %v235
    %v438 = vunpack.c.h.b16 %v235
    %v439 = vunpack.c.l.b16 %v236
    %v440 = vunpack.c.h.b16 %v236
    %v441 = vunpack.c.l.b16 %v237
    %v442 = vunpack.c.h.b16 %v237
    %v443 = vunpack.c.l.b16 %v238
    %v444 = vunpack.c.h.b16 %v238
    %v445 = vunpack.c.l.b16 %v239
    %v446 = vunpack.c.h.b16 %v239
    %v447 = vunpack.c.l.b16 %v240
    %v448 = vunpack.c.h.b16 %v240
    %v449 = vunpack.c.l.b16 %v241
    %v450 = vunpack.c.h.b16 %v241
    %v451 = vunpack.c.l.b16 %v242
    %v452 = vunpack.c.h.b16 %v242
    %v453 = vunpack.c.l.b16 %v243
    %v454 = vunpack.c.h.b16 %v243
    %v455 = vunpack.c.l.b16 %v244
    %v456 = vunpack.c.h.b16 %v244
    %v457 = vunpack.c.l.b16 %v245
    %v458 = vunpack.c.h.b16 %v245
    %v459 = vunpack.c.l.b16 %v246
    %v460 = vunpack.c.h.b16 %v246
    %v461 = vunpack.c.l.b16 %v247
    %v462 = vunpack.c.h.b16 %v247
    %v463 = vunpack.c.l.b16 %v248
    %v464 = vunpack.c.h.b16 %v248
    %v465 = vunpack.c.l.b16 %v249
    %v466 = vunpack.c.h.b16 %v249
    %v467 = vunpack.c.l.b16 %v250
    %v468 = vunpack.c.h.b16 %v250
    %v469 = vunpack.c.l.b16 %v251
    %v470 = vunpack.c.h.b16 %v251
    %v471 = vunpack.c.l.b16 %v252
    %v472 = vunpack.c.h.b16 %v252
    %v473 = vunpack.c.l.b16 %v253
    %v474 = vunpack.c.h.b16 %v253
    %v475 = vunpack.c.l.b16 %v254
    %v476 = vunpack.c.h.b16 %v254
    %v477 = vunpack.c.l.b16 %v255
    %v478 = vunpack.c.h.b16 %v255
    %v479 = vunpack.c.l.b16 %v256
    %v480 = vunpack.c.h.b16 %v256
    %v481 = vunpack.c.l.b16 %v257
    %v482 = vunpack.c.h.b16 %v257
    %v483 = vunpack.c.l.b16 %v258
    %v484 = vunpack.c.h.b16 %v258
    %v485 = vunpack.c.l.b16 %v259
    %v486 = vunpack.c.h.b16 %v259
    %v487 = vunpack.c.l.b16 %v260
    %v488 = vunpack.c.h.b16 %v260
    %v489 = vunpack.c.l.b16 %v261
    %v490 = vunpack.c.h.b16 %v261
    %v491 = vunpack.c.l.b16 %v262
    %v492 = vunpack.c.h.b16 %v262
    %v493 = vunpack.c.l.b16 %v263
    %v494 = vunpack.c.h.b16 %v263
    %v495 = vunpack.c.l.b16 %v264
    %v496 = vunpack.c.h.b16 %v264
    %v497 = vunpack.c.l.b16 %v265
    %v498 = vunpack.c.h.b16 %v265
    %v499 = vunpack.c.l.b16 %v266
    %v500 = vunpack.c.h.b16 %v266
    %v501 = vunpack.c.l.b16 %v267
    %v502 = vunpack.c.h.b16 %v267
    %v503 = vunpack.c.l.b16 %v268
    %v504 = vunpack.c.h.b16 %v268
    %v505 = vunpack.c.l.b16 %v269
    %v506 = vunpack.c.h.b16 %v269
    %v507 = vunpack.c.l.b16 %v270
    %v508 = vunpack.c.h.b16 %v270
    %v509 = vunpack.c.l.b16 %v271
    %v510 = vunpack.c.h.b16 %v271
    %v511 = vunpack.c.l.b16 %v272
    %v512 = vunpack.c.h.b16 %v272
    %v513 = vunpack.c.l.b16 %v273
    %v514 = vunpack.c.h.b16 %v273
    %v515 = vunpack.c.l.b16 %v274
    %v516 = vunpack.c.h.b16 %v274
    %v517 = vunpack.c.l.b16 %v275
    %v518 = vunpack.c.h.b16 %v275
    %v519 = vunpack.c.l.b16 %v276
    %v520 = vunpack.c.h.b16 %v276
    %v521 = vunpack.c.l.b16 %v277
    %v522 = vunpack.c.h.b16 %v277
    %v523 = vunpack.c.l.b16 %v278
    %v524 = vunpack.c.h.b16 %v278
    %v525 = vunpack.c.l.b16 %v279
    %v526 = vunpack.c.h.b16 %v279
    %v527 = vunpack.c.l.b16 %v280
    %v528 = vunpack.c.h.b16 %v280
    %v529 = vunpack.c.l.b16 %v281
    %v530 = vunpack.c.h.b16 %v281
    %v531 = vunpack.c.l.b16 %v282
    %v532 = vunpack.c.h.b16 %v282
    %v533 = vunpack.c.l.b16 %v283
    %v534 = vunpack.c.h.b16 %v283
    %v535 = vunpack.c.l.b16 %v284
    %v536 = vunpack.c.h.b16 %v284
    %v537 = vunpack.c.l.b16 %v285
    %v538 = vunpack.c.h.b16 %v285
    %v539 = vunpack.c.l.b16 %v286
    %v540 = vunpack.c.h.b16 %v286
    %v541 = vunpack.c.l.b16 %v287
    %v542 = vunpack.c.h.b16 %v287
    %v543 = vunpack.c.l.b16 %v288
    %v544 = vunpack.c.h.b16 %v288
    %v545 = vunpack.c.l.b16 %v289
    %v546 = vunpack.c.h.b16 %v289
    %v547 = vunpack.c.l.b16 %v290
    %v548 = vunpack.c.h.b16 %v290
    %v549 = vunpack.c.l.b16 %v291
    %v550 = vunpack.c.h.b16 %v291
    %v551 = vunpack.c.l.b16 %v292
    %v552 = vunpack.c.h.b16 %v292
    %v553 = vunpack.c.l.b16 %v293
    %v554 = vunpack.c.h.b16 %v293
    %v555 = vunpack.c.l.b16 %v294
    %v556 = vunpack.c.h.b16 %v294
    %v557 = vunpack.c.l.b16 %v295
    %v558 = vunpack.c.h.b16 %v295
    %v559 = vunpack.c.l.b16 %v296
    %v560 = vunpack.c.h.b16 %v296
    %v561 = vunpack.c.l.b16 %v297
    %v562 = vunpack.c.h.b16 %v297
    %v563 = vunpack.c.l.b16 %v298
    %v564 = vunpack.c.h.b16 %v298
    %v565 = vunpack.c.l.b16 %v299
    %v566 = vunpack.c.h.b16 %v299
    %v567 = vunpack.c.l.b16 %v300
    %v568 = vunpack.c.h.b16 %v300
    %v569 = vunpack.c.l.b16 %v301
    %v570 = vunpack.c.h.b16 %v301
    %v571 = vunpack.c.l.b16 %v302
    %v572 = vunpack.c.h.b16 %v302
    %v573 = vunpack.c.l.b16 %v303
    %v574 = vunpack.c.h.b16 %v303
    %v575 = vunpack.c.l.b16 %v304
    %v576 = vunpack.c.h.b16 %v304
    %v577 = vunpack.c.l.b16 %v305
    %v578 = vunpack.c.h.b16 %v305
    %v579 = vunpack.c.l.b16 %v306
    %v580 = vunpack.c.h.b16 %v306
    %v581 = vunpack.c.l.b16 %v307
    %v582 = vunpack.c.h.b16 %v307
    %v583 = vunpack.c.l.b16 %v308
    %v584 = vunpack.c.h.b16 %v308
    %v585 = vunpack.c.l.b16 %v309
    %v586 = vunpack.c.h.b16 %v309
    %v587 = vunpack.c.l.b16 %v310
    %v588 = vunpack.c.h.b16 %v310
    %v589 = vunpack.c.l.b16 %v311
    %v590 = vunpack.c.h.b16 %v311
    %v591 = vunpack.c.l.b16 %v312
    %v592 = vunpack.c.h.b16 %v312
    %v593 = vunpack.c.l.b16 %v313
    %v594 = vunpack.c.h.b16 %v313
    %v595 = vunpack.c.l.b16 %v314
    %v596 = vunpack.c.h.b16 %v314
    %v597 = vunpack.c.l.b16 %v315
    %v598 = vunpack.c.h.b16 %v315
    %v599 = vunpack.c.l.b16 %v316
    %v600 = vunpack.c.h.b16 %v316
    %v601 = vunpack.c.l.b16 %v317
    %v602 = vunpack.c.h.b16 %v317
    %v603 = vunpack.c.l.b16 %v318
    %v604 = vunpack.c.h.b16 %v318
    %v605 = vunpack.c.l.b16 %v319
    %v606 = vunpack.c.h.b16 %v319
    %v607 = vunpack.c.l.b16 %v320
    %v608 = vunpack.c.h.b16 %v320
    %v609 = vpack.c.b16 %v423, %v417
    %v610 = vpack.c.b16 %v424, %v418
    %v611 = vpack.c.b16 %v425, %v419
    %v612 = vpack.c.b16 %v426, %v420
    %v613 = vpack.c.b16 %v427, %v421
    %v614 = vpack.c.b16 %v428, %v422
    %v615 = vpack.c.b16 %v435, %v429
    %v616 = vpack.c.b16 %v436, %v430
    %v617 = vpack.c.b16 %v437, %v431
    %v618 = vpack.c.b16 %v438, %v432
    %v619 = vpack.c.b16 %v439, %v433
    %v620 = vpack.c.b16 %v440, %v434
    %v621 = vpack.c.b16 %v447, %v441
    %v622 = vpack.c.b16 %v448, %v442
    %v623 = vpack.c.b16 %v449, %v443
    %v624 = vpack.c.b16 %v450, %v444
    %v625 = vpack.c.b16 %v451, %v445
    %v626 = vpack.c.b16 %v452, %v446
    %v627 = vpack.c.b16 %v459, %v453
    %v628 = vpack.c.b16 %v460, %v454
    %v629 = vpack.c.b16 %v461, %v455
    %v630 = vpack.c.b16 %v462, %v456
    %v631 = vpack.c.b16 %v463, %v457
    %v632 = vpack.c.b16 %v464, %v458
    %v633 = vpack.c.b16 %v471, %v465
    %v634 = vpack.c.b16 %v472, %v466
    %v635 = vpack.c.b16 %v473, %v467
    %v636 = vpack.c.b16 %v474, %v468
    %v637 = vpack.c.b16 %v475, %v469
    %v638 = vpack.c.b16 %v476, %v470
    %v639 = vpack.c.b16 %v483, %v477
    %v640 = vpack.c.b16 %v484, %v478
    %v641 = vpack.c.b16 %v485, %v479
    %v642 = vpack.c.b16 %v486, %v480
    %v643 = vpack.c.b16 %v487, %v481
    %v644 = vpack.c.b16 %v488, %v482
    %v645 = vpack.c.b16 %v495, %v489
    %v646 = vpack.c.b16 %v496, %v490
    %v647 = vpack.c.b16 %v497, %v491
    %v648 = vpack.c.b16 %v498, %v492
    %v649 = vpack.c.b16 %v499, %v493
    %v650 = vpack.c.b16 %v500, %v494
    %v651 = vpack.c.b16 %v507, %v501
    %v652 = vpack.c.b16 %v508, %v502
    %v653 = vpack.c.b16 %v509, %v503
    %v654 = vpack.c.b16 %v510, %v504
    %v655 = vpack.c.b16 %v511, %v505
    %v656 = vpack.c.b16 %v512, %v506
    %v657 = vpack.c.b16 %v519, %v513
    %v658 = vpack.c.b16 %v520, %v514
    %v659 = vpack.c.b16 %v521, %v515
    %v660 = vpack.c.b16 %v522, %v516
    %v661 = vpack.c.b16 %v523, %v517
    %v662 = vpack.c.b16 %v524, %v518
    %v663 = vpack.c.b16 %v531, %v525
    %v664 = vpack.c.b16 %v532, %v526
    %v665 = vpack.c.b16 %v533, %v527
    %v666 = vpack.c.b16 %v534, %v528
    %v667 = vpack.c.b16 %v535, %v529
    %v668 = vpack.c.b16 %v536, %v530
    %v669 = vpack.c.b16 %v543, %v537
    %v670 = vpack.c.b16 %v544, %v538
    %v671 = vpack.c.b16 %v545, %v539
    %v672 = vpack.c.b16 %v546, %v540
    %v673 = vpack.c.b16 %v547, %v541
    %v674 = vpack.c.b16 %v548, %v542
    %v675 = vpack.c.b16 %v555, %v549
    %v676 = vpack.c.b16 %v556, %v550
    %v677 = vpack.c.b16 %v557, %v551
    %v678 = vpack.c.b16 %v558, %v552
    %v679 = vpack.c.b16 %v559, %v553
    %v680 = vpack.c.b16 %v560, %v554
    %v681 = vpack.c.b16 %v567, %v561
    %v682 = vpack.c.b16 %v568, %v562
    %v683 = vpack.c.b16 %v569, %v563
    %v684 = vpack.c.b16 %v570, %v564
    %v685 = vpack.c.b16 %v571, %v565
    %v686 = vpack.c.b16 %v572, %v566
    %v687 = vpack.c.b16 %v579, %v573
    %v688 = vpack.c.b16 %v580, %v574
    %v689 = vpack.c.b16 %v581, %v575
    %v690 = vpack.c.b16 %v582, %v576
    %v691 = vpack.c.b16 %v583, %v577
    %v692 = vpack.c.b16 %v584, %v578
    %v693 = vpack.c.b16 %v591, %v585
    %v694 = vpack.c.b16 %v592, %v586
    %v695 = vpack.c.b16 %v593, %v587
    %v696 = vpack.c.b16 %v594, %v588
    %v697 = vpack.c.b16 %v595, %v589
    %v698 = vpack.c.b16 %v596, %v590
    %v699 = vpack.c.b16 %v603, %v597
    %v700 = vpack.c.b16 %v604, %v598
    %v701 = vpack.c.b16 %v605, %v599
    %v702 = vpack.c.b16 %v606, %v600
    %v703 = vpack.c.b16 %v607, %v601
    %v704 = vpack.c.b16 %v608, %v602
    %801 = vmatprep.subr.bf16.mxu0 %v610
    %802 = vmatpush1.bf16.msra.mxu0 %v609
    %803 = vmatprep.subr.bf16.mxu0 %v616
    %804 = vmatpush1.bf16.msra.mxu0 %v615
    %805 = vmatprep.subr.bf16.mxu0 %v622
    %806 = vmatpush1.bf16.msra.mxu0 %v621
    %807 = vmatprep.subr.bf16.mxu0 %v628
    %808 = vmatpush1.bf16.msra.mxu0 %v627
    %809 = vmatprep.subr.bf16.mxu0 %v634
    %810 = vmatpush1.bf16.msra.mxu0 %v633
    %811 = vmatprep.subr.bf16.mxu0 %v640
    %812 = vmatpush1.bf16.msra.mxu0 %v639
    %813 = vmatprep.subr.bf16.mxu0 %v646
    %814 = vmatpush1.bf16.msra.mxu0 %v645
    %815 = vmatprep.subr.bf16.mxu0 %v652
    %816 = vmatpush1.bf16.msra.mxu0 %v651
    %817 = vmatprep.subr.bf16.mxu0 %v658
    %818 = vmatpush1.bf16.msra.mxu0 %v657
    %819 = vmatprep.subr.bf16.mxu0 %v664
    %820 = vmatpush1.bf16.msra.mxu0 %v663
    %821 = vmatprep.subr.bf16.mxu0 %v670
    %822 = vmatpush1.bf16.msra.mxu0 %v669
    %823 = vmatprep.subr.bf16.mxu0 %v676
    %824 = vmatpush1.bf16.msra.mxu0 %v675
    %825 = vmatprep.subr.bf16.mxu0 %v682
    %826 = vmatpush1.bf16.msra.mxu0 %v681
    %827 = vmatprep.subr.bf16.mxu0 %v688
    %828 = vmatpush1.bf16.msra.mxu0 %v687
    %829 = vmatprep.subr.bf16.mxu0 %v694
    %830 = vmatpush1.bf16.msra.mxu0 %v693
    %831 = vmatprep.subr.bf16.mxu0 %v700
    %832 = vmatpush1.bf16.msra.mxu0 %v699
    %833 = vmatprep.mubr.bf16.mxu0 %v224
    %834 = vmatmul.mubr.bf16.gmra.mrb[0].mxu0 %v223
    %v835 = vpop.f32.mrb[0].mxu0
    %v836 = vadd.f32 0.0, %v835
    %v837 = vpop.f32.mrb[0].mxu0
    %v838 = vadd.f32 0.0, %v837
    %v839 = vpop.f32.mrb[0].mxu0
    %v840 = vadd.f32 0.0, %v839
    %v841 = vpop.f32.mrb[0].mxu0
    %v842 = vadd.f32 0.0, %v841
    %843 = vdwg.mxu0
    %844 = vmatprep.subr.bf16.mxu0 %v612
    %845 = vmatpush1.bf16.msra.mxu0 %v611
    %846 = vmatprep.subr.bf16.mxu0 %v618
    %847 = vmatpush1.bf16.msra.mxu0 %v617
    %848 = vmatprep.subr.bf16.mxu0 %v624
    %849 = vmatpush1.bf16.msra.mxu0 %v623
    %850 = vmatprep.subr.bf16.mxu0 %v630
    %851 = vmatpush1.bf16.msra.mxu0 %v629
    %852 = vmatprep.subr.bf16.mxu0 %v636
    %853 = vmatpush1.bf16.msra.mxu0 %v635
    %854 = vmatprep.subr.bf16.mxu0 %v642
    %855 = vmatpush1.bf16.msra.mxu0 %v641
    %856 = vmatprep.subr.bf16.mxu0 %v648
    %857 = vmatpush1.bf16.msra.mxu0 %v647
    %858 = vmatprep.subr.bf16.mxu0 %v654
    %859 = vmatpush1.bf16.msra.mxu0 %v653
    %860 = vmatprep.subr.bf16.mxu0 %v660
    %861 = vmatpush1.bf16.msra.mxu0 %v659
    %862 = vmatprep.subr.bf16.mxu0 %v666
    %863 = vmatpush1.bf16.msra.mxu0 %v665
    %864 = vmatprep.subr.bf16.mxu0 %v672
    %865 = vmatpush1.bf16.msra.mxu0 %v671
    %866 = vmatprep.subr.bf16.mxu0 %v678
    %867 = vmatpush1.bf16.msra.mxu0 %v677
    %868 = vmatprep.subr.bf16.mxu0 %v684
    %869 = vmatpush1.bf16.msra.mxu0 %v683
    %870 = vmatprep.subr.bf16.mxu0 %v690
    %871 = vmatpush1.bf16.msra.mxu0 %v689
    %872 = vmatprep.subr.bf16.mxu0 %v696
    %873 = vmatpush1.bf16.msra.mxu0 %v695
    %874 = vmatprep.subr.bf16.mxu0 %v702
    %875 = vmatpush1.bf16.msra.mxu0 %v701
    %876 = vmatprep.mubr.bf16.mxu0 %v224
    %877 = vmatmul.mubr.bf16.gmra.mrb[0].mxu0 %v223
    %v878 = vpop.f32.mrb[0].mxu0
    %v879 = vadd.f32 0.0, %v878
    %v880 = vpop.f32.mrb[0].mxu0
    %v881 = vadd.f32 0.0, %v880
    %v882 = vpop.f32.mrb[0].mxu0
    %v883 = vadd.f32 0.0, %v882
    %v884 = vpop.f32.mrb[0].mxu0
    %v885 = vadd.f32 0.0, %v884
    %886 = vdwg.mxu0
    %887 = vmatprep.subr.bf16.mxu0 %v614
    %888 = vmatpush1.bf16.msra.mxu0 %v613
    %889 = vmatprep.subr.bf16.mxu0 %v620
    %890 = vmatpush1.bf16.msra.mxu0 %v619
    %891 = vmatprep.subr.bf16.mxu0 %v626
    %892 = vmatpush1.bf16.msra.mxu0 %v625
    %893 = vmatprep.subr.bf16.mxu0 %v632
    %894 = vmatpush1.bf16.msra.mxu0 %v631
    %895 = vmatprep.subr.bf16.mxu0 %v638
    %896 = vmatpush1.bf16.msra.mxu0 %v637
    %897 = vmatprep.subr.bf16.mxu0 %v644
    %898 = vmatpush1.bf16.msra.mxu0 %v643
    %899 = vmatprep.subr.bf16.mxu0 %v650
    %900 = vmatpush1.bf16.msra.mxu0 %v649
    %901 = vmatprep.subr.bf16.mxu0 %v656
    %902 = vmatpush1.bf16.msra.mxu0 %v655
    %903 = vmatprep.subr.bf16.mxu0 %v662
    %904 = vmatpush1.bf16.msra.mxu0 %v661
    %905 = vmatprep.subr.bf16.mxu0 %v668
    %906 = vmatpush1.bf16.msra.mxu0 %v667
    %907 = vmatprep.subr.bf16.mxu0 %v674
    %908 = vmatpush1.bf16.msra.mxu0 %v673
    %909 = vmatprep.subr.bf16.mxu0 %v680
    %910 = vmatpush1.bf16.msra.mxu0 %v679
    %911 = vmatprep.subr.bf16.mxu0 %v686
    %912 = vmatpush1.bf16.msra.mxu0 %v685
    %913 = vmatprep.subr.bf16.mxu0 %v692
    %914 = vmatpush1.bf16.msra.mxu0 %v691
    %915 = vmatprep.subr.bf16.mxu0 %v698
    %916 = vmatpush1.bf16.msra.mxu0 %v697
    %917 = vmatprep.subr.bf16.mxu0 %v704
    %918 = vmatpush1.bf16.msra.mxu0 %v703
    %919 = vmatprep.mubr.bf16.mxu0 %v224
    %920 = vmatmul.mubr.bf16.gmra.mrb[0].mxu0 %v223
    %v921 = vpop.f32.mrb[0].mxu0
    %v922 = vadd.f32 0.0, %v921
    %v923 = vpop.f32.mrb[0].mxu0
    %v924 = vadd.f32 0.0, %v923
    %v925 = vpop.f32.mrb[0].mxu0
    %v926 = vadd.f32 0.0, %v925
    %v927 = vpop.f32.mrb[0].mxu0
    %v928 = vadd.f32 0.0, %v927
    %929 = vdwg.mxu0
    %v930 = vmax.f32 %v836, %v838
    %v931 = vmax.f32 %v840, %v842
    %v932 = vmax.f32 %v930, %v879
    %v933 = vmax.f32 %v931, %v883
    %v934 = vmax.f32 %v932, %v881
    %v935 = vmax.f32 %v933, %v885
    %v936 = vmax.f32 %v934, %v922
    %v937 = vmax.f32 %v935, %v926
    %v938 = vmax.f32 %v936, %v924
    %v939 = vmax.f32 %v937, %v928
    %v940 = vld [vmem:[%s2] sm:$0x1]
    %v942 = vlaneseq
    %v943 = vshrl.u32 %v942, 7
    %v944 = vsub.s32 0, %v943
    %v945 = vrot.slane %v940, %v944
    %v947 = vadd.f32 %v938, %v945
    %v948 = vadd.f32 %v939, %v945
    %949 = vst [vmem:[#allocation5] sm:$0xff] %v947
    %950 = vst [vmem:[#allocation5 + $0x8] sm:$0xff] %v948
    // Predicated region
    $region18: #{tpu_custom_call.1} parent=1 // pred_check
      _
    $region19: #{tpu_custom_call.1} parent=1 // pred_check_branch
      %952 = sbr.rel (0) target = $region21
    $region20: #{tpu_custom_call.1} parent=1 // pred_region
      %s954 = ssub.s32 256, 256
      %955 = vsyncadd [#allocation4], %s954
      %s956 = sshll.u32 [#allocation5], 4
      %s957 = int_to_ptr.vmem [resolvable:$true] %s956
      %962 = dma.vmem_to_hbm [thread:$0]  %s957, 256, %s3, [#allocation4], 128, 128, 8
    $region21: #{tpu_custom_call.1} parent=1 // pred_fallthru
      _
    // Predicated region
    $region22: #{tpu_custom_call.1} parent=1 // pred_check
      _
    $region23: #{tpu_custom_call.1} parent=1 // pred_check_branch
      %964 = sbr.rel (0) target = $region25
    $region24: #{tpu_custom_call.1} parent=1 // pred_region
      %965 = dma.done [#allocation4], 256
    $region25: #{tpu_custom_call.1} parent=1 // pred_fallthru
      _
    %966 = vsyncpa [#allocation3], 1
    %967 = vsyncpa [#allocation4], 1

</llo_original>
